<compile_context>
chip_gen: v6e
topology: v6e:2x2x1
jax: 0.10.0
libtpu: 0.0.40
codegen_flags: <defaults>
</compile_context>

<pallas_src>
import functools

import jax
import jax.numpy as jnp
from jax.experimental import pallas as pl
from jax.experimental.pallas import tpu as pltpu

LANES = 128
SUBLANES = 8
DEFAULT_TILE_ROWS = 2048   # (2048, 128) f32 block = 1 MiB per input per grid step


def _dice_kernel(x_ref, t_ref, out_ref, acc_ref, *, n_total, tile_rows, needs_mask):
    c = pl.program_id(0)              # outer "parallel" (per-TensorCore) index
    j = pl.program_id(1)              # reduction step within this core
    tpc = pl.num_programs(1)

    @pl.when(j == 0)
    def _():
        acc_ref[...] = jnp.zeros_like(acc_ref)

    x = x_ref[...].astype(jnp.float32)
    t = t_ref[...].astype(jnp.float32)

    # sigmoid(x) == 0.5 * tanh(0.5 * x) + 0.5  (single, numerically stable EUP op)
    s = 0.5 * jnp.tanh(0.5 * x) + 0.5

    sub = tile_rows // SUBLANES

    def accumulate(sv, tv):
        # Fold rows onto the (8, LANES) accumulator with plain VPU adds (the
        # reshape is a pure vreg-group view); defer the cross-lane reduction
        # to the final step.
        acc_ref[0] += jnp.sum((sv * tv).reshape(sub, SUBLANES, LANES), axis=0)
        acc_ref[1] += jnp.sum(sv.reshape(sub, SUBLANES, LANES), axis=0)
        acc_ref[2] += jnp.sum(tv.reshape(sub, SUBLANES, LANES), axis=0)

    if needs_mask:
        # blk is the *logical* (unclamped) block id, so a duplicated tail block
        # (from the clamped index_map) masks to all-zero.
        blk = c * tpc + j
        base = blk * (tile_rows * LANES)
        is_full = (n_total - base) >= (tile_rows * LANES)

        @pl.when(is_full)
        def _():
            accumulate(s, t)          # common case: zero masking work

        @pl.when(jnp.logical_not(is_full))
        def _():
            row_ids = jax.lax.broadcasted_iota(jnp.int32, (tile_rows, LANES), 0)
            lane_ids = jax.lax.broadcasted_iota(jnp.int32, (tile_rows, LANES), 1)
            valid = (base + row_ids * LANES + lane_ids) < n_total
            accumulate(jnp.where(valid, s, 0.0), jnp.where(valid, t, 0.0))
    else:
        accumulate(s, t)

    @pl.when(j == tpc - 1)
    def _():
        out_ref[0, 0] = jnp.sum(acc_ref[0])   # partial intersection
        out_ref[0, 1] = jnp.sum(acc_ref[1])   # partial sum(sigmoid(inputs))
        out_ref[0, 2] = jnp.sum(acc_ref[2])   # partial sum(targets)


def dice_loss(inputs, targets):
    """1 - 2*sum(sigmoid(x)*t) / (sum(sigmoid(x)) + sum(t)); any identical shapes."""
    x = inputs.reshape(-1)      # keep native dtype -> minimal HBM traffic
    t = targets.reshape(-1)
    n = x.shape[0]

    # Pad (only if needed) to a whole number of (8, 128) vregs so the kernel's
    # row-fold reshape is always legal; padded elements are masked in-kernel.
    vreg = SUBLANES * LANES
    n_pad = pl.cdiv(n, vreg) * vreg
    if n_pad != n:
        x = jnp.pad(x, (0, n_pad - n))
        t = jnp.pad(t, (0, n_pad - n))

    rows = n_pad // LANES                       # multiple of 8
    tile_rows = min(DEFAULT_TILE_ROWS, rows)    # multiple of 8
    num_blocks = pl.cdiv(rows, tile_rows)

    # Split the reduction across both TensorCores on v7x; harmless on v5e/v6e.
    num_cores = 2 if num_blocks >= 2 else 1
    tiles_per_core = pl.cdiv(num_blocks, num_cores)

    # Masking can be compiled out entirely when full blocks exactly cover n.
    needs_mask = (n_pad != n) or (rows % tile_rows != 0) or \
                 (num_cores * tiles_per_core != num_blocks)

    x2 = x.reshape(rows, LANES)
    t2 = t.reshape(rows, LANES)

    def blk_map(c, j):
        # Clamp so the block index never leaves the array; a duplicated tail
        # block (if any) is fully masked in-kernel via the flat-index check.
        return (jnp.minimum(c * tiles_per_core + j, num_blocks - 1), 0)

    kernel = functools.partial(_dice_kernel, n_total=n, tile_rows=tile_rows,
                               needs_mask=needs_mask)

    partials = pl.pallas_call(
        kernel,
        out_shape=jax.ShapeDtypeStruct((num_cores, 3), jnp.float32),
        grid_spec=pltpu.PrefetchScalarGridSpec(
            num_scalar_prefetch=0,
            grid=(num_cores, tiles_per_core),
            in_specs=[
                pl.BlockSpec((tile_rows, LANES), blk_map),
                pl.BlockSpec((tile_rows, LANES), blk_map),
            ],
            out_specs=pl.BlockSpec((1, 3), lambda c, j: (c, 0),
                                   memory_space=pltpu.SMEM),
            scratch_shapes=[pltpu.VMEM((3, SUBLANES, LANES), jnp.float32)],
        ),
        compiler_params=pltpu.CompilerParams(
            dimension_semantics=("parallel", "arbitrary"),
        ),
    )(x2, t2)

    intersection = jnp.sum(partials[:, 0])
    s_sum = jnp.sum(partials[:, 1])
    t_sum = jnp.sum(partials[:, 2])
    # No smoothing term, matching the reference module exactly.
    return 1.0 - 2.0 * intersection / (s_sum + t_sum)


def _reference(inputs, targets):
    s = jax.nn.sigmoid(inputs.astype(jnp.float32)).reshape(-1)
    t = targets.astype(jnp.float32).reshape(-1)
    return 1.0 - 2.0 * jnp.sum(s * t) / (jnp.sum(s) + jnp.sum(t))


if __name__ == "__main__":
    key = jax.random.PRNGKey(0)

    # Primary small NCHW shape consistent with the PyTorch module, plus a
    # ragged shape (exercises pad + mask) and a multi-block shape (exercises
    # the two-core parallel split and the partial-tail-block branch).
    shapes = [(2, 4, 16, 16), (3, 5, 7, 9), (4, 8, 96, 128)]
    for shp in shapes:
        key, k1, k2 = jax.random.split(key, 3)
        inputs = jax.random.normal(k1, shp, dtype=jnp.float32)
        targets = (jax.random.uniform(k2, shp) > 0.5).astype(jnp.float32)

        loss = dice_loss(inputs, targets)
        jax.block_until_ready(loss)

        ref = _reference(inputs, targets)
        assert jnp.allclose(loss, ref, atol=1e-5, rtol=1e-5), (shp, loss, ref)

    print("KERNEL_OK")
</pallas_src>

<mosaic_0001>
module attributes {stable_mosaic.version = 11 : i64} {
  func.func @_dice_kernel(%arg0: i32, %arg1: i32, %arg2: memref<16x128xf32, #tpu.memory_space<vmem>>, %arg3: memref<16x128xf32, #tpu.memory_space<vmem>>, %arg4: memref<1x3xf32, #tpu.memory_space<smem>>, %arg5: memref<3x8x128xf32, #tpu.memory_space<vmem>>) attributes {dimension_semantics = [#tpu.dimension_semantics<parallel>, #tpu.dimension_semantics<arbitrary>], iteration_bounds = array<i64: 1, 1>, scalar_prefetch = 0 : i64, scratch_operands = 1 : i64, tpu.core_type = #tpu.core_type<tc>, window_params = [{transform_indices = @transform_0, window_bounds = array<i64: 16, 128>}, {transform_indices = @transform_1, window_bounds = array<i64: 16, 128>}, {transform_indices = @transform_2, window_bounds = array<i64: 1, 3>}]} {
    %c0_i32 = arith.constant 0 : i32
    %0 = arith.cmpi eq, %arg1, %c0_i32 : i32
    %1 = arith.extui %0 : i1 to i32
    %c0_i32_0 = arith.constant 0 : i32
    %2 = arith.cmpi ne, %1, %c0_i32_0 : i32
    scf.if %2 {
      %cst_27 = arith.constant 0.000000e+00 : f32
      %40 = vector.broadcast %cst_27 : f32 to vector<3x8x128xf32>
      %c0_28 = arith.constant 0 : index
      %c0_29 = arith.constant 0 : index
      %c0_30 = arith.constant 0 : index
      %41 = vector.load %arg5[%c0_28, %c0_29, %c0_30] : memref<3x8x128xf32, #tpu.memory_space<vmem>>, vector<3x8x128xf32>
      tpu.vector_store %arg5[%c0_28, %c0_29, %c0_30], %40 {strides = array<i32>} : memref<3x8x128xf32, #tpu.memory_space<vmem>>, vector<3x8x128xf32>,
    } else {
    }
    %c0 = arith.constant 0 : index
    %c0_1 = arith.constant 0 : index
    %3 = vector.load %arg2[%c0, %c0_1] : memref<16x128xf32, #tpu.memory_space<vmem>>, vector<16x128xf32>
    %c0_2 = arith.constant 0 : index
    %c0_3 = arith.constant 0 : index
    %4 = vector.load %arg3[%c0_2, %c0_3] : memref<16x128xf32, #tpu.memory_space<vmem>>, vector<16x128xf32>
    %cst = arith.constant 5.000000e-01 : f32
    %5 = vector.broadcast %cst : f32 to vector<16x128xf32>
    %6 = arith.mulf %5, %3 : vector<16x128xf32>
    %7 = math.tanh %6 : vector<16x128xf32>
    %cst_4 = arith.constant 5.000000e-01 : f32
    %8 = vector.broadcast %cst_4 : f32 to vector<16x128xf32>
    %9 = arith.mulf %8, %7 : vector<16x128xf32>
    %cst_5 = arith.constant 5.000000e-01 : f32
    %10 = vector.broadcast %cst_5 : f32 to vector<16x128xf32>
    %11 = arith.addf %9, %10 : vector<16x128xf32>
    %c0_6 = arith.constant 0 : index
    %c0_7 = arith.constant 0 : index
    %c0_8 = arith.constant 0 : index
    %12 = vector.load %arg5[%c0_6, %c0_7, %c0_8] : memref<3x8x128xf32, #tpu.memory_space<vmem>>, vector<1x8x128xf32>
    %13 = vector.shape_cast %12 : vector<1x8x128xf32> to vector<8x128xf32>
    %14 = arith.mulf %11, %4 : vector<16x128xf32>
    %15 = vector.shape_cast %14 : vector<16x128xf32> to vector<2x8x128xf32>
    %cst_9 = arith.constant dense<0.000000e+00> : vector<8x128xf32>
    %16 = vector.multi_reduction <add>, %15, %cst_9 [0] : vector<2x8x128xf32> to vector<8x128xf32>
    %17 = arith.addf %13, %16 : vector<8x128xf32>
    %c0_10 = arith.constant 0 : index
    %c0_11 = arith.constant 0 : index
    %c0_12 = arith.constant 0 : index
    %18 = vector.load %arg5[%c0_10, %c0_11, %c0_12] : memref<3x8x128xf32, #tpu.memory_space<vmem>>, vector<1x8x128xf32>
    %19 = vector.shape_cast %18 : vector<1x8x128xf32> to vector<8x128xf32>
    %20 = vector.shape_cast %17 : vector<8x128xf32> to vector<1x8x128xf32>
    tpu.vector_store %arg5[%c0_10, %c0_11, %c0_12], %20 {strides = array<i32>} : memref<3x8x128xf32, #tpu.memory_space<vmem>>, vector<1x8x128xf32>,
    %c1 = arith.constant 1 : index
    %c0_13 = arith.constant 0 : index
    %c0_14 = arith.constant 0 : index
    %21 = vector.load %arg5[%c1, %c0_13, %c0_14] : memref<3x8x128xf32, #tpu.memory_space<vmem>>, vector<1x8x128xf32>
    %22 = vector.shape_cast %21 : vector<1x8x128xf32> to vector<8x128xf32>
    %23 = vector.shape_cast %11 : vector<16x128xf32> to vector<2x8x128xf32>
    %cst_15 = arith.constant dense<0.000000e+00> : vector<8x128xf32>
    %24 = vector.multi_reduction <add>, %23, %cst_15 [0] : vector<2x8x128xf32> to vector<8x128xf32>
    %25 = arith.addf %22, %24 : vector<8x128xf32>
    %c1_16 = arith.constant 1 : index
    %c0_17 = arith.constant 0 : index
    %c0_18 = arith.constant 0 : index
    %26 = vector.load %arg5[%c1_16, %c0_17, %c0_18] : memref<3x8x128xf32, #tpu.memory_space<vmem>>, vector<1x8x128xf32>
    %27 = vector.shape_cast %26 : vector<1x8x128xf32> to vector<8x128xf32>
    %28 = vector.shape_cast %25 : vector<8x128xf32> to vector<1x8x128xf32>
    tpu.vector_store %arg5[%c1_16, %c0_17, %c0_18], %28 {strides = array<i32>} : memref<3x8x128xf32, #tpu.memory_space<vmem>>, vector<1x8x128xf32>,
    %c2 = arith.constant 2 : index
    %c0_19 = arith.constant 0 : index
    %c0_20 = arith.constant 0 : index
    %29 = vector.load %arg5[%c2, %c0_19, %c0_20] : memref<3x8x128xf32, #tpu.memory_space<vmem>>, vector<1x8x128xf32>
    %30 = vector.shape_cast %29 : vector<1x8x128xf32> to vector<8x128xf32>
    %31 = vector.shape_cast %4 : vector<16x128xf32> to vector<2x8x128xf32>
    %cst_21 = arith.constant dense<0.000000e+00> : vector<8x128xf32>
    %32 = vector.multi_reduction <add>, %31, %cst_21 [0] : vector<2x8x128xf32> to vector<8x128xf32>
    %33 = arith.addf %30, %32 : vector<8x128xf32>
    %c2_22 = arith.constant 2 : index
    %c0_23 = arith.constant 0 : index
    %c0_24 = arith.constant 0 : index
    %34 = vector.load %arg5[%c2_22, %c0_23, %c0_24] : memref<3x8x128xf32, #tpu.memory_space<vmem>>, vector<1x8x128xf32>
    %35 = vector.shape_cast %34 : vector<1x8x128xf32> to vector<8x128xf32>
    %36 = vector.shape_cast %33 : vector<8x128xf32> to vector<1x8x128xf32>
    tpu.vector_store %arg5[%c2_22, %c0_23, %c0_24], %36 {strides = array<i32>} : memref<3x8x128xf32, #tpu.memory_space<vmem>>, vector<1x8x128xf32>,
    %c0_i32_25 = arith.constant 0 : i32
    %37 = arith.cmpi eq, %arg1, %c0_i32_25 : i32
    %38 = arith.extui %37 : i1 to i32
    %c0_i32_26 = arith.constant 0 : i32
    %39 = arith.cmpi ne, %38, %c0_i32_26 : i32
    scf.if %39 {
      %c0_27 = arith.constant 0 : index
      %c0_28 = arith.constant 0 : index
      %c0_29 = arith.constant 0 : index
      %40 = vector.load %arg5[%c0_27, %c0_28, %c0_29] : memref<3x8x128xf32, #tpu.memory_space<vmem>>, vector<1x8x128xf32>
      %41 = vector.shape_cast %40 : vector<1x8x128xf32> to vector<8x128xf32>
      %42 = vector.shape_cast %41 : vector<8x128xf32> to vector<1x8x128xf32>
      %cst_30 = arith.constant dense<0.000000e+00> : vector<1xf32>
      %43 = vector.multi_reduction <add>, %42, %cst_30 [1, 2] : vector<1x8x128xf32> to vector<1xf32>
      %44 = vector.shape_cast %43 : vector<1xf32> to vector<1x1x1xf32>
      %45 = vector.extract %44[0, 0, 0] : f32 from vector<1x1x1xf32>
      %c0_31 = arith.constant 0 : index
      %c0_32 = arith.constant 0 : index
      %46 = memref.load %arg4[%c0_31, %c0_32] : memref<1x3xf32, #tpu.memory_space<smem>>
      memref.store %45, %arg4[%c0_31, %c0_32] : memref<1x3xf32, #tpu.memory_space<smem>>
      %c1_33 = arith.constant 1 : index
      %c0_34 = arith.constant 0 : index
      %c0_35 = arith.constant 0 : index
      %47 = vector.load %arg5[%c1_33, %c0_34, %c0_35] : memref<3x8x128xf32, #tpu.memory_space<vmem>>, vector<1x8x128xf32>
      %48 = vector.shape_cast %47 : vector<1x8x128xf32> to vector<8x128xf32>
      %49 = vector.shape_cast %48 : vector<8x128xf32> to vector<1x8x128xf32>
      %cst_36 = arith.constant dense<0.000000e+00> : vector<1xf32>
      %50 = vector.multi_reduction <add>, %49, %cst_36 [1, 2] : vector<1x8x128xf32> to vector<1xf32>
      %51 = vector.shape_cast %50 : vector<1xf32> to vector<1x1x1xf32>
      %52 = vector.extract %51[0, 0, 0] : f32 from vector<1x1x1xf32>
      %c0_37 = arith.constant 0 : index
      %c1_38 = arith.constant 1 : index
      %53 = memref.load %arg4[%c0_37, %c1_38] : memref<1x3xf32, #tpu.memory_space<smem>>
      memref.store %52, %arg4[%c0_37, %c1_38] : memref<1x3xf32, #tpu.memory_space<smem>>
      %c2_39 = arith.constant 2 : index
      %c0_40 = arith.constant 0 : index
      %c0_41 = arith.constant 0 : index
      %54 = vector.load %arg5[%c2_39, %c0_40, %c0_41] : memref<3x8x128xf32, #tpu.memory_space<vmem>>, vector<1x8x128xf32>
      %55 = vector.shape_cast %54 : vector<1x8x128xf32> to vector<8x128xf32>
      %56 = vector.shape_cast %55 : vector<8x128xf32> to vector<1x8x128xf32>
      %cst_42 = arith.constant dense<0.000000e+00> : vector<1xf32>
      %57 = vector.multi_reduction <add>, %56, %cst_42 [1, 2] : vector<1x8x128xf32> to vector<1xf32>
      %58 = vector.shape_cast %57 : vector<1xf32> to vector<1x1x1xf32>
      %59 = vector.extract %58[0, 0, 0] : f32 from vector<1x1x1xf32>
      %c0_43 = arith.constant 0 : index
      %c2_44 = arith.constant 2 : index
      %60 = memref.load %arg4[%c0_43, %c2_44] : memref<1x3xf32, #tpu.memory_space<smem>>
      memref.store %59, %arg4[%c0_43, %c2_44] : memref<1x3xf32, #tpu.memory_space<smem>>
    } else {
    }
    return
  }
  func.func @transform_0(%arg0: i32, %arg1: i32) -> (i32, i32) {
    %c1_i32 = arith.constant 1 : i32
    %0 = arith.muli %arg0, %c1_i32 : i32
    %1 = arith.addi %0, %arg1 : i32
    %c0_i32 = arith.constant 0 : i32
    %2 = arith.minsi %1, %c0_i32 : i32
    %c0_i32_0 = arith.constant 0 : i32
    %c0_i32_1 = arith.constant 0 : i32
    return %2, %c0_i32_0 : i32, i32
  }
  func.func @transform_1(%arg0: i32, %arg1: i32) -> (i32, i32) {
    %c1_i32 = arith.constant 1 : i32
    %0 = arith.muli %arg0, %c1_i32 : i32
    %1 = arith.addi %0, %arg1 : i32
    %c0_i32 = arith.constant 0 : i32
    %2 = arith.minsi %1, %c0_i32 : i32
    %c0_i32_0 = arith.constant 0 : i32
    %c0_i32_1 = arith.constant 0 : i32
    return %2, %c0_i32_0 : i32, i32
  }
  func.func @transform_2(%arg0: i32, %arg1: i32) -> (i32, i32) {
    %c0_i32 = arith.constant 0 : i32
    %c0_i32_0 = arith.constant 0 : i32
    return %arg0, %c0_i32 : i32, i32
  }
}

</mosaic_0001>

<llo_original>
// kernel: tpu_custom_call.1
$region0: #{tpu_custom_call.1}
  #allocation0 [shape = 'u32[]', space=smem, size = 0x4, offset = 0x4, fixed_abs, tag = 'smem constant byte address 0x4 - core index']
  #allocation1 [shape = 'u32[144,128]{1,0:T(1,128)}', space=vmem, size = 0x12000, scoped, tag = 'internal scratch']
  #allocation2 [shape = 'f32[3,8,128]{2,1,0:T(8,128)}', space=vmem, size = 0x3000, scoped, tag = 'scratch operand']
  %s0 = inlined_call_operand.hbm [shape: f32[16,128], index: 0, kind: input, shape index: {}]
  %s1 = inlined_call_operand.hbm [shape: f32[16,128], index: 1, kind: input, shape index: {}]
  %s2 = inlined_call_operand.hbm [shape: f32[1,3], index: 2, kind: output, shape index: {}]
  %s3 = sld [smem:[#allocation0]]
  $region34: #{tpu_custom_call.1} parent=0
    _
  %s5 = ssub.s32 1, %s3
  %s6 = scalar_select 0, %s5, %s3
  $region1: #{tpu_custom_call.1} parent=0
    #allocation3 [shape = 'u8[8192]{0}', space=vmem, size = 0x2000, scoped, tag = 'input window, operand 0, single buffered']
    #allocation4 [shape = 's32[1]{0}', space=sflag, size = 0x4, scoped, tag = 'scoped memory for tpu_custom_call.1']
    #allocation5 [shape = 's32[1]{0}', space=sflag, size = 0x4, scoped, tag = 'scoped memory for tpu_custom_call.1']
    #allocation6 [shape = 'u8[8192]{0}', space=vmem, size = 0x2000, scoped, tag = 'input window, operand 1, single buffered']
    #allocation7 [shape = 's32[1]{0}', space=sflag, size = 0x4, scoped, tag = 'scoped memory for tpu_custom_call.1']
    #allocation8 [shape = 'u8[512]{0}', space=smem, size = 0x200, scoped, tag = 'output window, operand 0, single buffered']
    %7 = vsyncpa [#allocation4], 0
    %8 = vsyncpa [#allocation7], 0
    %9 = vsyncpa [#allocation5], 0
    // Predicated region
    $region2: #{tpu_custom_call.1} parent=1 // pred_check
      _
    $region3: #{tpu_custom_call.1} parent=1 // pred_check_branch
      %11 = sbr.rel (0) target = $region5
    $region4: #{tpu_custom_call.1} parent=1 // pred_region
      %s12 = sadd.s32 0, 0
      %p13 = scmp.lt.s32.totalorder %s12, 0
      %s14 = scalar_select %p13, %s12, 0
      %s15 = smul.u32 2, %s14
      %s17 = ssub.s32 256, 256
      %18 = vsyncadd [#allocation4], %s17
      %s19 = smul.addr %s15, 128
      %s20 = scalar_lea.hbm %s0, %s19
      %s21 = sshll.u32 [#allocation3], 4
      %s22 = int_to_ptr.vmem [resolvable:$true] %s21
      %27 = dma.hbm_to_vmem [thread:$0]  %s20, 256, %s22, [#allocation4], 128, 128, 8
    $region5: #{tpu_custom_call.1} parent=1 // pred_fallthru
      _
    // Predicated region
    $region6: #{tpu_custom_call.1} parent=1 // pred_check
      _
    $region7: #{tpu_custom_call.1} parent=1 // pred_check_branch
      %29 = sbr.rel (0) target = $region9
    $region8: #{tpu_custom_call.1} parent=1 // pred_region
      %s30 = sadd.s32 0, 0
      %p31 = scmp.lt.s32.totalorder %s30, 0
      %s32 = scalar_select %p31, %s30, 0
      %s33 = smul.u32 2, %s32
      %s35 = ssub.s32 256, 256
      %36 = vsyncadd [#allocation7], %s35
      %s37 = smul.addr %s33, 128
      %s38 = scalar_lea.hbm %s1, %s37
      %s39 = sshll.u32 [#allocation6], 4
      %s40 = int_to_ptr.vmem [resolvable:$true] %s39
      %45 = dma.hbm_to_vmem [thread:$0]  %s38, 256, %s40, [#allocation7], 128, 128, 8
    $region9: #{tpu_custom_call.1} parent=1 // pred_fallthru
      _
    // Predicated region
    $region10: #{tpu_custom_call.1} parent=1 // pred_check
      _
    $region11: #{tpu_custom_call.1} parent=1 // pred_check_branch
      %47 = sbr.rel (0) target = $region13
    $region12: #{tpu_custom_call.1} parent=1 // pred_region
      %48 = dma.done [#allocation4], 256
    $region13: #{tpu_custom_call.1} parent=1 // pred_fallthru
      _
    // Predicated region
    $region14: #{tpu_custom_call.1} parent=1 // pred_check
      _
    $region15: #{tpu_custom_call.1} parent=1 // pred_check_branch
      %50 = sbr.rel (0) target = $region17
    $region16: #{tpu_custom_call.1} parent=1 // pred_region
      %51 = dma.done [#allocation7], 256
    $region17: #{tpu_custom_call.1} parent=1 // pred_fallthru
      _
    %s52 = sadd.s32 0, 0
    %p53 = scmp.lt.s32.totalorder %s52, 0
    %s54 = scalar_select %p53, %s52, 0
    %s55 = smul.u32 2, %s54
    %s56 = sadd.s32 0, 0
    %p57 = scmp.lt.s32.totalorder %s56, 0
    %s58 = scalar_select %p57, %s56, 0
    %s59 = smul.u32 2, %s58
    %p60 = scmp.eq.s32.totalorder 0, 0
    // Predicated region
    $region18: #{tpu_custom_call.1} parent=1 // pred_check
      %p61 = pneg %p60
    $region19: #{tpu_custom_call.1} parent=1 // pred_check_branch
      %63 = sbr.rel (%p61) target = $region21
    $region20: #{tpu_custom_call.1} parent=1 // pred_region
      %64 = vst [vmem:[#allocation2] sm:$0xff] 0.0
      %65 = vst [vmem:[#allocation2 + $0x8] sm:$0xff] 0.0
      %66 = vst [vmem:[#allocation2 + $0x10] sm:$0xff] 0.0
    $region21: #{tpu_custom_call.1} parent=1 // pred_fallthru
      _
    %v67 = vld [vmem:[#allocation3] sm:$0xff]
    %v68 = vld [vmem:[#allocation3 + $0x8] sm:$0xff]
    %v69 = vld [vmem:[#allocation6] sm:$0xff]
    %v70 = vld [vmem:[#allocation6 + $0x8] sm:$0xff]
    %v71 = vmul.f32 %v67, 0.5
    %v72 = vmul.f32 %v68, 0.5
    %v73 = vtanh.pop %v71
    %v74 = vtanh.pop %v72
    %v75 = vmul.f32 %v73, 0.5
    %v76 = vmul.f32 %v74, 0.5
    %v77 = vadd.f32 %v75, 0.5
    %v78 = vadd.f32 %v76, 0.5
    %v79 = vld [vmem:[#allocation2] sm:$0xff]
    %v80 = vmul.f32 %v77, %v69
    %v81 = vmul.f32 %v78, %v70
    %v82 = vadd.f32 %v80, %v81
    %v83 = vadd.f32 %v79, %v82
    %84 = vst [vmem:[#allocation2] sm:$0xff] %v83
    %s85 = scalar_lea.vmem [#allocation2], 8
    %v86 = vld [vmem:[%s85] sm:$0xff]
    %v87 = vadd.f32 %v77, %v78
    %v88 = vadd.f32 %v86, %v87
    %89 = vst [vmem:[%s85] sm:$0xff] %v88
    %s90 = scalar_lea.vmem [#allocation2], 16
    %v91 = vld [vmem:[%s90] sm:$0xff]
    %v92 = vadd.f32 %v69, %v70
    %v93 = vadd.f32 %v91, %v92
    %94 = vst [vmem:[%s90] sm:$0xff] %v93
    // Predicated region
    $region22: #{tpu_custom_call.1} parent=1 // pred_check
      %p95 = pneg %p60
    $region23: #{tpu_custom_call.1} parent=1 // pred_check_branch
      %97 = sbr.rel (%p95) target = $region25
    $region24: #{tpu_custom_call.1} parent=1 // pred_region
      %v98 = vld [vmem:[#allocation2] sm:$0xff]
      %99 = vadd.xlane.f32.xlu0 %v98
      %v100 = vpop.xlane.xlu0 %99
      %v101 = vrot.slane %v100, 4
      %v102 = vadd.f32 %v100, %v101
      %v103 = vrot.slane %v102, 2
      %v104 = vadd.f32 %v102, %v103
      %v105 = vrot.slane %v104, 1
      %v106 = vadd.f32 %v104, %v105
      %s107 = vtos %v106
      %s108 = scalar_lea.smem [#allocation8], 0
      %109 = sst [smem:[%s108]] %s107
      %v110 = vld [vmem:[%s85] sm:$0xff]
      %111 = vadd.xlane.f32.xlu0 %v110
      %v112 = vpop.xlane.xlu0 %111
      %v113 = vrot.slane %v112, 4
      %v114 = vadd.f32 %v112, %v113
      %v115 = vrot.slane %v114, 2
      %v116 = vadd.f32 %v114, %v115
      %v117 = vrot.slane %v116, 1
      %v118 = vadd.f32 %v116, %v117
      %s119 = vtos %v118
      %s120 = scalar_lea.smem [#allocation8], 1
      %121 = sst [smem:[%s120]] %s119
      %v122 = vld [vmem:[%s90] sm:$0xff]
      %123 = vadd.xlane.f32.xlu0 %v122
      %v124 = vpop.xlane.xlu0 %123
      %v125 = vrot.slane %v124, 4
      %v126 = vadd.f32 %v124, %v125
      %v127 = vrot.slane %v126, 2
      %v128 = vadd.f32 %v126, %v127
      %v129 = vrot.slane %v128, 1
      %v130 = vadd.f32 %v128, %v129
      %s131 = vtos %v130
      %s132 = scalar_lea.smem [#allocation8], 2
      %133 = sst [smem:[%s132]] %s131
    $region25: #{tpu_custom_call.1} parent=1 // pred_fallthru
      _
    // Predicated region
    $region26: #{tpu_custom_call.1} parent=1 // pred_check
      _
    $region27: #{tpu_custom_call.1} parent=1 // pred_check_branch
      %135 = sbr.rel (0) target = $region29
    $region28: #{tpu_custom_call.1} parent=1 // pred_region
      %s137 = ssub.s32 16, 16
      %138 = vsyncadd [#allocation5], %s137
      %141 = dma.smem_to_hbm [#allocation8], 16, %s2, [#allocation5]
    $region29: #{tpu_custom_call.1} parent=1 // pred_fallthru
      _
    // Predicated region
    $region30: #{tpu_custom_call.1} parent=1 // pred_check
      _
    $region31: #{tpu_custom_call.1} parent=1 // pred_check_branch
      %143 = sbr.rel (0) target = $region33
    $region32: #{tpu_custom_call.1} parent=1 // pred_region
      %144 = dma.done [#allocation5], 16
    $region33: #{tpu_custom_call.1} parent=1 // pred_fallthru
      _
    %145 = sfence
    %146 = vsyncpa [#allocation4], 1
    %147 = vsyncpa [#allocation7], 1
    %148 = vsyncpa [#allocation5], 1

</llo_original>
